<compile_context>
chip_gen: v6e
topology: v6e:2x2x1
jax: 0.10.0
libtpu: 0.0.40
codegen_flags: <defaults>
</compile_context>

<pallas_src>
import math
from functools import partial

import numpy as np
import jax
import jax.numpy as jnp
from jax.experimental import pallas as pl
from jax.experimental.pallas import tpu as pltpu


def _round_up(x, m):
    return ((x + m - 1) // m) * m


# ---------------------------------------------------------------------------
# Fused kernel:  logits_tile = relu(x_tile @ M + cb) @ G + fb
# ---------------------------------------------------------------------------

def _fused_forward_kernel(x_ref, m_ref, cb_ref, g_ref, fb_ref, out_ref):
    # Conv (as a dense matmul on the MXU) + bias + ReLU -> lane-dense (tile_b, 1024)
    feats = jnp.dot(x_ref[...], m_ref[...], preferred_element_type=jnp.float32)
    feats = jnp.maximum(feats + cb_ref[...], 0.0)
    # fc1 on the MXU; f32 accumulation, f32 bias add; lane-dense (tile_b, 128) store.
    logits = jnp.dot(feats.astype(g_ref.dtype), g_ref[...],
                     preferred_element_type=jnp.float32)
    out_ref[...] = logits + fb_ref[...]


def cnn003_forward(x_nchw, fused_params, block_b=None):
    """Fused forward pass. x_nchw is (B, Cin, H, W) in PyTorch layout."""
    M = fused_params["M"]
    cb = fused_params["cb"]
    G = fused_params["G"]
    fb = fused_params["fb"]
    n_classes = fused_params["n_classes"]

    B = x_nchw.shape[0]
    k_in, n_feat = M.shape
    n_pad = G.shape[1]

    # Pure row-major flatten of each sample (no transpose, no data amplification).
    x_flat = x_nchw.reshape(B, -1).astype(M.dtype)
    if x_flat.shape[1] != k_in:
        raise ValueError(f"expected {k_in} input features/sample, got {x_flat.shape[1]}")

    if block_b is None:
        block_b = min(256, _round_up(B, 8))
    block_b = _round_up(block_b, 8)              # sublane-friendly batch tile
    b_pad = _round_up(B, block_b)
    if b_pad != B:
        x_flat = jnp.pad(x_flat, ((0, b_pad - B), (0, 0)))

    out = pl.pallas_call(
        _fused_forward_kernel,
        out_shape=jax.ShapeDtypeStruct((b_pad, n_pad), jnp.float32),
        grid=(b_pad // block_b,),
        in_specs=[
            pl.BlockSpec((block_b, k_in), lambda i: (i, 0)),   # x batch tile
            pl.BlockSpec((k_in, n_feat), lambda i: (0, 0)),    # M  (resident across steps)
            pl.BlockSpec((1, n_feat), lambda i: (0, 0)),       # conv bias (tiled)
            pl.BlockSpec((n_feat, n_pad), lambda i: (0, 0)),   # G  (resident across steps)
            pl.BlockSpec((1, n_pad), lambda i: (0, 0)),        # fc bias (padded)
        ],
        out_specs=pl.BlockSpec((block_b, n_pad), lambda i: (i, 0)),
        compiler_params=pltpu.CompilerParams(
            dimension_semantics=("parallel",),
            vmem_limit_bytes=32 * 1024 * 1024,
        ),
    )(x_flat, M, cb, G, fb)

    return out[:B, :n_classes]


# ---------------------------------------------------------------------------
# One-time parameter folding (done at setup time, outside the hot path)
# ---------------------------------------------------------------------------

def prepare_params(conv_w, conv_b, fc_w, fc_b, H, W, dtype=jnp.float32):
    """Fold PyTorch-shaped params into kernel-friendly matrices.

    Feature-column order used by the kernel: j = (oh*OW + ow)*Cout + co.
    M  : (Cin*H*W, 1024) dense matrix equivalent to the valid 3x3 conv.
    cb : (1, 1024) conv bias tiled per feature column.
    G  : (1024, Npad) fc1 weight with columns permuted to the kernel order and
         n_classes zero-padded up to a multiple of 128 (lane-dense store).
    fb : (1, Npad) padded fc1 bias.
    """
    conv_w = np.asarray(conv_w, np.float32)
    conv_b = np.asarray(conv_b, np.float32)
    fc_w = np.asarray(fc_w, np.float32)
    fc_b = np.asarray(fc_b, np.float32)

    c_out, c_in, kh_sz, kw_sz = conv_w.shape
    oh_sz, ow_sz = H - kh_sz + 1, W - kw_sz + 1
    n_pos = oh_sz * ow_sz
    n_feat = n_pos * c_out
    n_classes = fc_w.shape[0]
    if fc_w.shape[1] != n_feat:
        raise ValueError("view(-1, 1024) requires Cout*(H-2)*(W-2) == fc1 in_features")

    # Conv -> dense Toeplitz-style matrix, columns in (oh, ow, co) order.
    m6 = np.zeros((c_in, H, W, oh_sz, ow_sz, c_out), np.float32)
    for oh in range(oh_sz):
        for ow in range(ow_sz):
            for kh in range(kh_sz):
                for kw in range(kw_sz):
                    m6[:, oh + kh, ow + kw, oh, ow, :] = conv_w[:, :, kh, kw].T
    m_mat = m6.reshape(c_in * H * W, n_feat)
    cb = np.tile(conv_b, n_pos).reshape(1, n_feat)

    # fc1: x @ W^T is invariant to a shared permutation of the contraction axis,
    # so permute the weight columns from PyTorch (co, oh, ow) order to the
    # kernel's (oh, ow, co) order once here (kills the per-step transpose).
    g = fc_w.reshape(n_classes, c_out, n_pos).transpose(2, 1, 0).reshape(n_feat, n_classes)
    n_pad = _round_up(n_classes, 128)
    g_pad = np.zeros((n_feat, n_pad), np.float32)
    g_pad[:, :n_classes] = g
    fb_pad = np.zeros((1, n_pad), np.float32)
    fb_pad[0, :n_classes] = fc_b

    return dict(
        M=jnp.asarray(m_mat, dtype),
        cb=jnp.asarray(cb, jnp.float32),
        G=jnp.asarray(g_pad, dtype),
        fb=jnp.asarray(fb_pad, jnp.float32),
        n_classes=n_classes,
    )


# ---------------------------------------------------------------------------
# Deterministic PyTorch-style parameter construction (mirrors module __init__)
# ---------------------------------------------------------------------------

def make_params(key, n_channels, n_classes):
    k_conv, k_fc = jax.random.split(key)

    # conv1: Conv2d(n_channels, 32, 3), kaiming_normal_ (fan_in, gain=sqrt(2)), bias=0
    fan_in_conv = n_channels * 3 * 3
    conv_w = jax.random.normal(k_conv, (32, n_channels, 3, 3),
                               jnp.float32) * math.sqrt(2.0 / fan_in_conv)
    conv_b = jnp.zeros((32,), jnp.float32)

    # fc1: Linear(1024, n_classes), PyTorch default uniform init
    fan_in_fc = 64 * 4 * 4
    bound = 1.0 / math.sqrt(fan_in_fc)
    kw, kb = jax.random.split(k_fc)
    fc_w = jax.random.uniform(kw, (n_classes, fan_in_fc), jnp.float32,
                              minval=-bound, maxval=bound)
    fc_b = jax.random.uniform(kb, (n_classes,), jnp.float32,
                              minval=-bound, maxval=bound)
    return conv_w, conv_b, fc_w, fc_b


def reference_forward(x_nchw, raw_params):
    """Plain-JAX reference identical to the PyTorch forward (self-check only)."""
    conv_w, conv_b, fc_w, fc_b = raw_params
    feats = jax.lax.conv_general_dilated(
        x_nchw, conv_w, window_strides=(1, 1), padding="VALID",
        dimension_numbers=("NCHW", "OIHW", "NCHW"),
        precision=jax.lax.Precision.HIGHEST)
    feats = jnp.maximum(feats + conv_b[None, :, None, None], 0.0)
    flat = feats.reshape(-1, feats.shape[1] * feats.shape[2] * feats.shape[3])
    return jnp.dot(flat, fc_w.T, precision=jax.lax.Precision.HIGHEST) + fc_b


if __name__ == "__main__":
    n_channels, n_classes = 1, 10
    # The forward requires 32*(H-2)*(W-2) == 1024 so view(-1, 1024) maps one
    # sample -> one row; (H, W) = (6, 10) gives conv output (B, 32, 4, 8).
    B, H, W = 16, 6, 10

    key = jax.random.PRNGKey(0)
    k_x, k_p = jax.random.split(key)
    x = jax.random.normal(k_x, (B, n_channels, H, W), jnp.float32)

    raw_params = make_params(k_p, n_channels, n_classes)
    fused_params = prepare_params(*raw_params, H=H, W=W)   # one-time weight folding

    fwd = jax.jit(partial(cnn003_forward, fused_params=fused_params, block_b=8))
    logits = fwd(x)
    jax.block_until_ready(logits)
    assert logits.shape == (B, n_classes), logits.shape

    # Numerical self-check against a plain-JAX reference of the PyTorch forward.
    ref = reference_forward(x, raw_params)
    max_err = float(jnp.max(jnp.abs(logits - ref)))
    assert max_err < 2e-2, f"mismatch vs reference: max abs err = {max_err}"

    print("KERNEL_OK")
</pallas_src>

<mosaic_0001>
module attributes {stable_mosaic.version = 11 : i64} {
  func.func @_fused_forward_kernel(%arg0: i32, %arg1: memref<8x60xf32, #tpu.memory_space<vmem>>, %arg2: memref<60x1024xf32, #tpu.memory_space<vmem>>, %arg3: memref<1x1024xf32, #tpu.memory_space<vmem>>, %arg4: memref<1024x128xf32, #tpu.memory_space<vmem>>, %arg5: memref<1x128xf32, #tpu.memory_space<vmem>>, %arg6: memref<8x128xf32, #tpu.memory_space<vmem>>) attributes {dimension_semantics = [#tpu.dimension_semantics<parallel>], iteration_bounds = array<i64: 2>, scalar_prefetch = 0 : i64, scratch_operands = 0 : i64, tpu.core_type = #tpu.core_type<tc>, window_params = [{transform_indices = @transform_0, window_bounds = array<i64: 8, 60>}, {pipeline_mode = #tpu.pipeline_mode<synchronous>, transform_indices = @transform_1, window_bounds = array<i64: 60, 1024>}, {pipeline_mode = #tpu.pipeline_mode<synchronous>, transform_indices = @transform_2, window_bounds = array<i64: 1, 1024>}, {pipeline_mode = #tpu.pipeline_mode<synchronous>, transform_indices = @transform_3, window_bounds = array<i64: 1024, 128>}, {pipeline_mode = #tpu.pipeline_mode<synchronous>, transform_indices = @transform_4, window_bounds = array<i64: 1, 128>}, {transform_indices = @transform_5, window_bounds = array<i64: 8, 128>}]} {
    %c0 = arith.constant 0 : index
    %c0_0 = arith.constant 0 : index
    %0 = vector.load %arg1[%c0, %c0_0] : memref<8x60xf32, #tpu.memory_space<vmem>>, vector<8x60xf32>
    %c0_1 = arith.constant 0 : index
    %c0_2 = arith.constant 0 : index
    %1 = vector.load %arg2[%c0_1, %c0_2] : memref<60x1024xf32, #tpu.memory_space<vmem>>, vector<60x1024xf32>
    %cst = arith.constant dense<0.000000e+00> : vector<8x1024xf32>
    %2 = tpu.matmul %0, %1, %cst {dimension_numbers = #tpu.dot_dimension_numbers<[1], [0], [0], [1], [0, 0, 1, 1], [], []>} : vector<8x60xf32>, vector<60x1024xf32>, vector<8x1024xf32> -> vector<8x1024xf32>
    %c0_3 = arith.constant 0 : index
    %c0_4 = arith.constant 0 : index
    %3 = vector.load %arg3[%c0_3, %c0_4] : memref<1x1024xf32, #tpu.memory_space<vmem>>, vector<1x1024xf32>
    %4 = vector.broadcast %3 : vector<1x1024xf32> to vector<8x1024xf32>
    %5 = arith.addf %2, %4 : vector<8x1024xf32>
    %cst_5 = arith.constant 0.000000e+00 : f32
    %6 = vector.broadcast %cst_5 : f32 to vector<8x1024xf32>
    %7 = arith.maximumf %5, %6 : vector<8x1024xf32>
    %c0_6 = arith.constant 0 : index
    %c0_7 = arith.constant 0 : index
    %8 = vector.load %arg4[%c0_6, %c0_7] : memref<1024x128xf32, #tpu.memory_space<vmem>>, vector<1024x128xf32>
    %cst_8 = arith.constant dense<0.000000e+00> : vector<8x128xf32>
    %9 = tpu.matmul %7, %8, %cst_8 {dimension_numbers = #tpu.dot_dimension_numbers<[1], [0], [0], [1], [0, 0, 1, 1], [], []>} : vector<8x1024xf32>, vector<1024x128xf32>, vector<8x128xf32> -> vector<8x128xf32>
    %c0_9 = arith.constant 0 : index
    %c0_10 = arith.constant 0 : index
    %10 = vector.load %arg5[%c0_9, %c0_10] : memref<1x128xf32, #tpu.memory_space<vmem>>, vector<1x128xf32>
    %11 = vector.broadcast %10 : vector<1x128xf32> to vector<8x128xf32>
    %12 = arith.addf %9, %11 : vector<8x128xf32>
    %c0_11 = arith.constant 0 : index
    %c0_12 = arith.constant 0 : index
    %13 = vector.load %arg6[%c0_11, %c0_12] : memref<8x128xf32, #tpu.memory_space<vmem>>, vector<8x128xf32>
    tpu.vector_store %arg6[%c0_11, %c0_12], %12 {strides = array<i32>} : memref<8x128xf32, #tpu.memory_space<vmem>>, vector<8x128xf32>,
    return
  }
  func.func @transform_0(%arg0: i32) -> (i32, i32) {
    %c0_i32 = arith.constant 0 : i32
    %c0_i32_0 = arith.constant 0 : i32
    return %arg0, %c0_i32 : i32, i32
  }
  func.func @transform_1(%arg0: i32) -> (i32, i32) {
    %c0_i32 = arith.constant 0 : i32
    %c0_i32_0 = arith.constant 0 : i32
    %c0_i32_1 = arith.constant 0 : i32
    return %c0_i32, %c0_i32_0 : i32, i32
  }
  func.func @transform_2(%arg0: i32) -> (i32, i32) {
    %c0_i32 = arith.constant 0 : i32
    %c0_i32_0 = arith.constant 0 : i32
    %c0_i32_1 = arith.constant 0 : i32
    return %c0_i32, %c0_i32_0 : i32, i32
  }
  func.func @transform_3(%arg0: i32) -> (i32, i32) {
    %c0_i32 = arith.constant 0 : i32
    %c0_i32_0 = arith.constant 0 : i32
    %c0_i32_1 = arith.constant 0 : i32
    return %c0_i32, %c0_i32_0 : i32, i32
  }
  func.func @transform_4(%arg0: i32) -> (i32, i32) {
    %c0_i32 = arith.constant 0 : i32
    %c0_i32_0 = arith.constant 0 : i32
    %c0_i32_1 = arith.constant 0 : i32
    return %c0_i32, %c0_i32_0 : i32, i32
  }
  func.func @transform_5(%arg0: i32) -> (i32, i32) {
    %c0_i32 = arith.constant 0 : i32
    %c0_i32_0 = arith.constant 0 : i32
    return %arg0, %c0_i32 : i32, i32
  }
}

</mosaic_0001>

<llo_original>
// kernel: cnn003_forward.1
$region0: #{cnn003_forward.1}
  #allocation0 [shape = 'u32[]', space=smem, size = 0x4, offset = 0x4, fixed_abs, tag = 'smem constant byte address 0x4 - core index']
  #allocation1 [shape = 'u32[144,128]{1,0:T(1,128)}', space=vmem, size = 0x12000, scoped, tag = 'internal scratch']
  %s0 = inlined_call_operand.vmem [shape: f32[16,60], index: 0, kind: input, shape index: {}]
  %s1 = inlined_call_operand.hbm [shape: f32[60,1024], index: 1, kind: input, shape index: {}]
  %s2 = inlined_call_operand.vmem [shape: f32[1,1024], index: 2, kind: input, shape index: {}]
  %s3 = inlined_call_operand.hbm [shape: f32[1024,128], index: 3, kind: input, shape index: {}]
  %s4 = inlined_call_operand.vmem [shape: f32[1,128], index: 4, kind: input, shape index: {}]
  %s5 = inlined_call_operand.hbm [shape: f32[16,128], index: 5, kind: output, shape index: {}]
  %s6 = sld [smem:[#allocation0]]
  $region61: #{cnn003_forward.1} parent=0
    _
  %s8 = ssub.s32 1, %s6
  %s9 = scalar_select 0, %s8, %s6
  $region1: #{cnn003_forward.1} parent=0
    #allocation2 [shape = 'u8[262144]{0}', space=vmem, size = 0x40000, scoped, tag = 'input window, operand 1, single buffered']
    #allocation3 [shape = 's32[2]{0}', space=sflag, size = 0x8, scoped, tag = 'scoped memory for cnn003_forward.1']
    #allocation4 [shape = 's32[2]{0}', space=sflag, size = 0x8, scoped, tag = 'scoped memory for cnn003_forward.1']
    #allocation5 [shape = 'u8[524288]{0}', space=vmem, size = 0x80000, scoped, tag = 'input window, operand 3, single buffered']
    #allocation6 [shape = 's32[1]{0}', space=sflag, size = 0x4, scoped, tag = 'scoped memory for cnn003_forward.1']
    #allocation7 [shape = 'u8[8192]{0}', space=vmem, size = 0x2000, scoped, tag = 'output window, operand 0']
    %10 = vsyncpa [#allocation3], 0
    %11 = vsyncpa [#allocation6], 0
    %12 = vsyncpa [#allocation4], 0
    %s13 = scalar_lea.sflag [#allocation4], 1
    %14 = vsyncpa %s13, 0
    loop: start=0, step=1, limit=4
    $region2: #{cnn003_forward.1} parent=1 // loop_pre_header
      _
    $region3: #{cnn003_forward.1} parent=1 // loop_header
      %s16 = sphi 0, %s20
      %p17 = scmp.ge.s32.totalorder %s16, 4
      %s26 = sphi 0, %s28
      %s29 = sphi 0, %s26
      %s30 = sphi 0, %s29
      %s46 = sphi 0, %s30
      %s50 = sphi 0, %s50
      %s52 = sphi 0, %s50
      %s53 = sphi 0, %s52
      %s67 = sphi 0, %s53
      %s71 = sphi 0, %s71
      %s73 = sphi 0, %s71
      %s74 = sphi 0, %s73
      %s88 = sphi 0, %s74
      %s92 = sphi 0, %s92
      %s94 = sphi 0, %s92
      %s95 = sphi 0, %s94
      %s109 = sphi 0, %s95
      %s113 = sphi 0, %s113
      %s115 = sphi 0, %s113
      %s116 = sphi 0, %s115
      %s130 = sphi 0, %s116
      %s136 = sphi 0, %s138
      %s139 = sphi 0, %s136
      %s140 = sphi 0, %s139
      %s156 = sphi 0, %s140
    $region4: #{cnn003_forward.1} parent=1 // loop_header_branch
      %19 = sbr.rel (%p17) target = $region8
    $region5: #{cnn003_forward.1} parent=1 // loop_body
      %s21 = ssub.s32 %s16, 1
      %s22 = ssub.s32 %s16, 2
      %s23 = sadd.s32 %s16, 1
      %s24 = ssub.s32 %s16, %s23
      %p25 = scmp.eq.s32.totalorder %s24, 0
      %s27 = sadd.s32 %s26, 1
      %s28 = scalar_select %p25, %s26, %s27
      %p31 = pneg %p25
      %p32 = scmp.eq.s32.totalorder %s16, 1
      %p33 = por %p31, %p32
      %p34 = scmp.ne.s32.totalorder %s26, %s29
      %p35 = scmp.eq.s32.totalorder %s16, 0
      %p36 = por %p34, %p35
      %p37 = scmp.ne.s32.totalorder %s26, %s29
      %p38 = scmp.eq.s32.totalorder %s21, 1
      %p39 = por %p37, %p38
      %p40 = scmp.ne.s32.totalorder %s29, %s30
      %p41 = scmp.eq.s32.totalorder %s21, 0
      %p42 = por %p40, %p41
      %p43 = scmp.ne.s32.totalorder %s29, %s30
      %p44 = scmp.eq.s32.totalorder %s22, 1
      %p45 = por %p43, %p44
      %p47 = scmp.ne.s32.totalorder %s30, %s46
      %p48 = scmp.eq.s32.totalorder %s22, 0
      %p49 = por %p47, %p48
      %s51 = sadd.s32 %s50, 1
      %p54 = scmp.eq.s32.totalorder %s16, 1
      %p55 = scmp.ne.s32.totalorder %s50, %s52
      %p56 = scmp.eq.s32.totalorder %s16, 0
      %p57 = por %p55, %p56
      %p58 = scmp.ne.s32.totalorder %s50, %s52
      %p59 = scmp.eq.s32.totalorder %s21, 1
      %p60 = por %p58, %p59
      %p61 = scmp.ne.s32.totalorder %s52, %s53
      %p62 = scmp.eq.s32.totalorder %s21, 0
      %p63 = por %p61, %p62
      %p64 = scmp.ne.s32.totalorder %s52, %s53
      %p65 = scmp.eq.s32.totalorder %s22, 1
      %p66 = por %p64, %p65
      %p68 = scmp.ne.s32.totalorder %s53, %s67
      %p69 = scmp.eq.s32.totalorder %s22, 0
      %p70 = por %p68, %p69
      %s72 = sadd.s32 %s71, 1
      %p75 = scmp.eq.s32.totalorder %s16, 1
      %p76 = scmp.ne.s32.totalorder %s71, %s73
      %p77 = scmp.eq.s32.totalorder %s16, 0
      %p78 = por %p76, %p77
      %p79 = scmp.ne.s32.totalorder %s71, %s73
      %p80 = scmp.eq.s32.totalorder %s21, 1
      %p81 = por %p79, %p80
      %p82 = scmp.ne.s32.totalorder %s73, %s74
      %p83 = scmp.eq.s32.totalorder %s21, 0
      %p84 = por %p82, %p83
      %p85 = scmp.ne.s32.totalorder %s73, %s74
      %p86 = scmp.eq.s32.totalorder %s22, 1
      %p87 = por %p85, %p86
      %p89 = scmp.ne.s32.totalorder %s74, %s88
      %p90 = scmp.eq.s32.totalorder %s22, 0
      %p91 = por %p89, %p90
      %s93 = sadd.s32 %s92, 1
      %p96 = scmp.eq.s32.totalorder %s16, 1
      %p97 = scmp.ne.s32.totalorder %s92, %s94
      %p98 = scmp.eq.s32.totalorder %s16, 0
      %p99 = por %p97, %p98
      %p100 = scmp.ne.s32.totalorder %s92, %s94
      %p101 = scmp.eq.s32.totalorder %s21, 1
      %p102 = por %p100, %p101
      %p103 = scmp.ne.s32.totalorder %s94, %s95
      %p104 = scmp.eq.s32.totalorder %s21, 0
      %p105 = por %p103, %p104
      %p106 = scmp.ne.s32.totalorder %s94, %s95
      %p107 = scmp.eq.s32.totalorder %s22, 1
      %p108 = por %p106, %p107
      %p110 = scmp.ne.s32.totalorder %s95, %s109
      %p111 = scmp.eq.s32.totalorder %s22, 0
      %p112 = por %p110, %p111
      %s114 = sadd.s32 %s113, 1
      %p117 = scmp.eq.s32.totalorder %s16, 1
      %p118 = scmp.ne.s32.totalorder %s113, %s115
      %p119 = scmp.eq.s32.totalorder %s16, 0
      %p120 = por %p118, %p119
      %p121 = scmp.ne.s32.totalorder %s113, %s115
      %p122 = scmp.eq.s32.totalorder %s21, 1
      %p123 = por %p121, %p122
      %p124 = scmp.ne.s32.totalorder %s115, %s116
      %p125 = scmp.eq.s32.totalorder %s21, 0
      %p126 = por %p124, %p125
      %p127 = scmp.ne.s32.totalorder %s115, %s116
      %p128 = scmp.eq.s32.totalorder %s22, 1
      %p129 = por %p127, %p128
      %p131 = scmp.ne.s32.totalorder %s116, %s130
      %p132 = scmp.eq.s32.totalorder %s22, 0
      %p133 = por %p131, %p132
      %s134 = ssub.s32 %s16, %s23
      %p135 = scmp.eq.s32.totalorder %s134, 0
      %s137 = sadd.s32 %s136, 1
      %s138 = scalar_select %p135, %s136, %s137
      %p141 = pneg %p135
      %p142 = scmp.eq.s32.totalorder %s16, 1
      %p143 = por %p141, %p142
      %p144 = scmp.ne.s32.totalorder %s136, %s139
      %p145 = scmp.eq.s32.totalorder %s16, 0
      %p146 = por %p144, %p145
      %p147 = scmp.ne.s32.totalorder %s136, %s139
      %p148 = scmp.eq.s32.totalorder %s21, 1
      %p149 = por %p147, %p148
      %p150 = scmp.ne.s32.totalorder %s139, %s140
      %p151 = scmp.eq.s32.totalorder %s21, 0
      %p152 = por %p150, %p151
      %p153 = scmp.ne.s32.totalorder %s139, %s140
      %p154 = scmp.eq.s32.totalorder %s22, 1
      %p155 = por %p153, %p154
      %p157 = scmp.ne.s32.totalorder %s140, %s156
      %p158 = scmp.eq.s32.totalorder %s22, 0
      %p159 = por %p157, %p158
      %p160 = scmp.le.s32.totalorder 1, %s16
      %p161 = scmp.lt.s32.totalorder %s16, 3
      %p162 = pnand %p160, %p161
      %p163 = pneg %p162
      // Predicated region
      $region9: #{cnn003_forward.1} parent=5 // pred_check
        _
      $region10: #{cnn003_forward.1} parent=5 // pred_check_branch
        %165 = sbr.rel (%p162) target = $region12
      $region11: #{cnn003_forward.1} parent=5 // pred_region
        %s166 = ssub.s32 %s16, 1
        // Predicated region
        $region13: #{cnn003_forward.1} parent=11 // pred_check
          %p167 = pneg %p63
        $region14: #{cnn003_forward.1} parent=11 // pred_check_branch
          %169 = sbr.rel (%p167) target = $region16
        $region15: #{cnn003_forward.1} parent=11 // pred_region
          %s171 = ssub.s32 8192, 8192
          %172 = vsyncadd [#allocation3], %s171
          %s173 = sshll.u32 [#allocation2], 4
          %s174 = int_to_ptr.vmem [resolvable:$true] %s173
          %179 = dma.hbm_to_vmem [thread:$0]  %s1, 8192, %s174, [#allocation3], 1024, 1024, 64
        $region16: #{cnn003_forward.1} parent=11 // pred_fallthru
          _
        // Predicated region
        $region17: #{cnn003_forward.1} parent=11 // pred_check
          %p180 = pneg %p84
        $region18: #{cnn003_forward.1} parent=11 // pred_check_branch
          %182 = sbr.rel (%p180) target = $region20
        $region19: #{cnn003_forward.1} parent=11 // pred_region
          _
        $region20: #{cnn003_forward.1} parent=11 // pred_fallthru
          _
        // Predicated region
        $region21: #{cnn003_forward.1} parent=11 // pred_check
          %p183 = pneg %p105
        $region22: #{cnn003_forward.1} parent=11 // pred_check_branch
          %185 = sbr.rel (%p183) target = $region24
        $region23: #{cnn003_forward.1} parent=11 // pred_region
          %s187 = ssub.s32 16384, 16384
          %188 = vsyncadd [#allocation6], %s187
          %s189 = sshll.u32 [#allocation5], 4
          %s190 = int_to_ptr.vmem [resolvable:$true] %s189
          %195 = dma.hbm_to_vmem [thread:$0]  %s3, 16384, %s190, [#allocation6], 128, 128, 8
        $region24: #{cnn003_forward.1} parent=11 // pred_fallthru
          _
        // Predicated region
        $region25: #{cnn003_forward.1} parent=11 // pred_check
          %p196 = pneg %p126
        $region26: #{cnn003_forward.1} parent=11 // pred_check_branch
          %198 = sbr.rel (%p196) target = $region28
        $region27: #{cnn003_forward.1} parent=11 // pred_region
          _
        $region28: #{cnn003_forward.1} parent=11 // pred_fallthru
          _
      $region12: #{cnn003_forward.1} parent=5 // pred_fallthru
        _
      %p199 = scmp.lt.s32.totalorder %s16, 2
      // Predicated region
      $region29: #{cnn003_forward.1} parent=5 // pred_check
        %p200 = pneg %p199
      $region30: #{cnn003_forward.1} parent=5 // pred_check_branch
        %202 = sbr.rel (%p200) target = $region32
      $region31: #{cnn003_forward.1} parent=5 // pred_region
        // Predicated region
        $region33: #{cnn003_forward.1} parent=31 // pred_check
          %p203 = pneg %p36
        $region34: #{cnn003_forward.1} parent=31 // pred_check_branch
          %205 = sbr.rel (%p203) target = $region36
        $region35: #{cnn003_forward.1} parent=31 // pred_region
          %p206 = scmp.lt.s32.totalorder %s16, 1
          %s207 = scalar_select %p206, %s16, 1
          %s208 = smul.addr %s207, 8
          %s209 = scalar_lea.vmem %s0, %s208
        $region36: #{cnn003_forward.1} parent=31 // pred_fallthru
          _
      $region32: #{cnn003_forward.1} parent=5 // pred_fallthru
        _
      %p210 = scmp.le.s32.totalorder 1, %s16
      %p211 = scmp.lt.s32.totalorder %s16, 3
      %p212 = pnand %p210, %p211
      %p213 = pneg %p212
      // Predicated region
      $region37: #{cnn003_forward.1} parent=5 // pred_check
        _
      $region38: #{cnn003_forward.1} parent=5 // pred_check_branch
        %215 = sbr.rel (%p212) target = $region40
      $region39: #{cnn003_forward.1} parent=5 // pred_region
        %s216 = ssub.s32 %s16, 1
        // Predicated region
        $region41: #{cnn003_forward.1} parent=39 // pred_check
          %p217 = pneg %p63
        $region42: #{cnn003_forward.1} parent=39 // pred_check_branch
          %219 = sbr.rel (%p217) target = $region44
        $region43: #{cnn003_forward.1} parent=39 // pred_region
          %220 = dma.done [#allocation3], 8192
        $region44: #{cnn003_forward.1} parent=39 // pred_fallthru
          _
        // Predicated region
        $region45: #{cnn003_forward.1} parent=39 // pred_check
          %p221 = pneg %p105
        $region46: #{cnn003_forward.1} parent=39 // pred_check_branch
          %223 = sbr.rel (%p221) target = $region48
        $region47: #{cnn003_forward.1} parent=39 // pred_region
          %224 = dma.done [#allocation6], 16384
        $region48: #{cnn003_forward.1} parent=39 // pred_fallthru
          _
        %p225 = scmp.lt.s32.totalorder %s21, 1
        %s226 = scalar_select %p225, %s21, 1
        %s227 = smul.addr %s226, 8
        %s228 = scalar_lea.vmem %s0, %s227
        %p229 = pneg %p42
        %p230 = pneg %p39
        %p231 = pneg %p63
        %p232 = pneg %p60
        %p233 = pneg %p84
        %p234 = pneg %p81
        %p235 = pneg %p105
        %p236 = pneg %p102
        %p237 = pneg %p126
        %p238 = pneg %p123
        %p239 = pneg %p152
        %p240 = pneg %p149
        %s241 = sand.u32 %s139, 1
        %s242 = scalar_lea.sflag [#allocation4], %s241
        %s243 = sand.u32 %s139, 1
        %s244 = smul.addr %s243, 8
        %s245 = scalar_lea.vmem [#allocation7], %s244
        %p246 = scmp.lt.s32.totalorder %s21, 1
        %s247 = scalar_select %p246, %s21, 1
        %s248 = smul.addr %s247, 8
        %s249 = scalar_lea.vmem %s0, %s248
        %v250 = vld [vmem:[%s249] sm:$0xff]
        %v251 = vld [vmem:[#allocation2] sm:$0xff]
        %v252 = vld [vmem:[#allocation2 + $0x8] sm:$0xff]
        %v253 = vld [vmem:[#allocation2 + $0x10] sm:$0xff]
        %v254 = vld [vmem:[#allocation2 + $0x18] sm:$0xff]
        %v255 = vld [vmem:[#allocation2 + $0x20] sm:$0xff]
        %v256 = vld [vmem:[#allocation2 + $0x28] sm:$0xff]
        %v257 = vld [vmem:[#allocation2 + $0x30] sm:$0xff]
        %v258 = vld [vmem:[#allocation2 + $0x38] sm:$0xff]
        %v259 = vld [vmem:[#allocation2 + $0x40] sm:$0xff]
        %v260 = vld [vmem:[#allocation2 + $0x48] sm:$0xff]
        %v261 = vld [vmem:[#allocation2 + $0x50] sm:$0xff]
        %v262 = vld [vmem:[#allocation2 + $0x58] sm:$0xff]
        %v263 = vld [vmem:[#allocation2 + $0x60] sm:$0xff]
        %v264 = vld [vmem:[#allocation2 + $0x68] sm:$0xff]
        %v265 = vld [vmem:[#allocation2 + $0x70] sm:$0xff]
        %v266 = vld [vmem:[#allocation2 + $0x78] sm:$0xff]
        %v267 = vld [vmem:[#allocation2 + $0x80] sm:$0xff]
        %v268 = vld [vmem:[#allocation2 + $0x88] sm:$0xff]
        %v269 = vld [vmem:[#allocation2 + $0x90] sm:$0xff]
        %v270 = vld [vmem:[#allocation2 + $0x98] sm:$0xff]
        %v271 = vld [vmem:[#allocation2 + $0xa0] sm:$0xff]
        %v272 = vld [vmem:[#allocation2 + $0xa8] sm:$0xff]
        %v273 = vld [vmem:[#allocation2 + $0xb0] sm:$0xff]
        %v274 = vld [vmem:[#allocation2 + $0xb8] sm:$0xff]
        %v275 = vld [vmem:[#allocation2 + $0xc0] sm:$0xff]
        %v276 = vld [vmem:[#allocation2 + $0xc8] sm:$0xff]
        %v277 = vld [vmem:[#allocation2 + $0xd0] sm:$0xff]
        %v278 = vld [vmem:[#allocation2 + $0xd8] sm:$0xff]
        %v279 = vld [vmem:[#allocation2 + $0xe0] sm:$0xff]
        %v280 = vld [vmem:[#allocation2 + $0xe8] sm:$0xff]
        %v281 = vld [vmem:[#allocation2 + $0xf0] sm:$0xff]
        %v282 = vld [vmem:[#allocation2 + $0xf8] sm:$0xff]
        %v283 = vld [vmem:[#allocation2 + $0x100] sm:$0xff]
        %v284 = vld [vmem:[#allocation2 + $0x108] sm:$0xff]
        %v285 = vld [vmem:[#allocation2 + $0x110] sm:$0xff]
        %v286 = vld [vmem:[#allocation2 + $0x118] sm:$0xff]
        %v287 = vld [vmem:[#allocation2 + $0x120] sm:$0xff]
        %v288 = vld [vmem:[#allocation2 + $0x128] sm:$0xff]
        %v289 = vld [vmem:[#allocation2 + $0x130] sm:$0xff]
        %v290 = vld [vmem:[#allocation2 + $0x138] sm:$0xff]
        %v291 = vld [vmem:[#allocation2 + $0x140] sm:$0xff]
        %v292 = vld [vmem:[#allocation2 + $0x148] sm:$0xff]
        %v293 = vld [vmem:[#allocation2 + $0x150] sm:$0xff]
        %v294 = vld [vmem:[#allocation2 + $0x158] sm:$0xff]
        %v295 = vld [vmem:[#allocation2 + $0x160] sm:$0xff]
        %v296 = vld [vmem:[#allocation2 + $0x168] sm:$0xff]
        %v297 = vld [vmem:[#allocation2 + $0x170] sm:$0xff]
        %v298 = vld [vmem:[#allocation2 + $0x178] sm:$0xff]
        %v299 = vld [vmem:[#allocation2 + $0x180] sm:$0xff]
        %v300 = vld [vmem:[#allocation2 + $0x188] sm:$0xff]
        %v301 = vld [vmem:[#allocation2 + $0x190] sm:$0xff]
        %v302 = vld [vmem:[#allocation2 + $0x198] sm:$0xff]
        %v303 = vld [vmem:[#allocation2 + $0x1a0] sm:$0xff]
        %v304 = vld [vmem:[#allocation2 + $0x1a8] sm:$0xff]
        %v305 = vld [vmem:[#allocation2 + $0x1b0] sm:$0xff]
        %v306 = vld [vmem:[#allocation2 + $0x1b8] sm:$0xff]
        %v307 = vld [vmem:[#allocation2 + $0x1c0] sm:$0xf]
        %v308 = vld [vmem:[#allocation2 + $0x1c8] sm:$0xf]
        %v309 = vld [vmem:[#allocation2 + $0x1d0] sm:$0xf]
        %v310 = vld [vmem:[#allocation2 + $0x1d8] sm:$0xf]
        %v311 = vld [vmem:[#allocation2 + $0x1e0] sm:$0xf]
        %v312 = vld [vmem:[#allocation2 + $0x1e8] sm:$0xf]
        %v313 = vld [vmem:[#allocation2 + $0x1f0] sm:$0xf]
        %v314 = vld [vmem:[#allocation2 + $0x1f8] sm:$0xf]
        %v315 = vld [vmem:[%s2] sm:$0xff]
        %v317 = vlaneseq
        %v318 = vshrl.u32 %v317, 7
        %v319 = vsub.s32 0, %v318
        %v320 = vrot.slane %v315, %v319
        %v321 = vlaneseq
        %v322 = vshrl.u32 %v321, 7
        %v323 = vsub.s32 1, %v322
        %v324 = vrot.slane %v315, %v323
        %v325 = vlaneseq
        %v326 = vshrl.u32 %v325, 7
        %v327 = vsub.s32 2, %v326
        %v328 = vrot.slane %v315, %v327
        %v329 = vlaneseq
        %v330 = vshrl.u32 %v329, 7
        %v331 = vsub.s32 3, %v330
        %v332 = vrot.slane %v315, %v331
        %v333 = vlaneseq
        %v334 = vshrl.u32 %v333, 7
        %v335 = vsub.s32 4, %v334
        %v336 = vrot.slane %v315, %v335
        %v337 = vlaneseq
        %v338 = vshrl.u32 %v337, 7
        %v339 = vsub.s32 5, %v338
        %v340 = vrot.slane %v315, %v339
        %v341 = vlaneseq
        %v342 = vshrl.u32 %v341, 7
        %v343 = vsub.s32 6, %v342
        %v344 = vrot.slane %v315, %v343
        %v345 = vlaneseq
        %v346 = vshrl.u32 %v345, 7
        %v347 = vsub.s32 7, %v346
        %v348 = vrot.slane %v315, %v347
        %vm357 = vcmask 490496
        %v359 = vsel %vm357, %v250, 0
        %vm361 = vcmask 1043456
        %v363 = vsel %vm361, %v307, 0
        %v366 = vsel %vm361, %v308, 0
        %v369 = vsel %vm361, %v309, 0
        %v372 = vsel %vm361, %v310, 0
        %v375 = vsel %vm361, %v311, 0
        %v378 = vsel %vm361, %v312, 0
        %v381 = vsel %vm361, %v313, 0
        %v384 = vsel %vm361, %v314, 0
        %386 = vmatprep.subr.mxu0 0.0
        %387 = vmatpush1.msra.mxu0 0.0
        %388 = vmatprep.subr.mxu0 0.0
        %389 = vmatpush1.msra.mxu0 0.0
        %390 = vmatprep.subr.mxu0 0.0
        %391 = vmatpush1.msra.mxu0 0.0
        %392 = vmatprep.subr.mxu0 0.0
        %393 = vmatpush1.msra.mxu0 0.0
        %394 = vmatprep.subr.mxu0 0.0
        %395 = vmatpush1.msra.mxu0 0.0
        %396 = vmatprep.subr.mxu0 0.0
        %397 = vmatpush1.msra.mxu0 0.0
        %398 = vmatprep.subr.mxu0 0.0
        %399 = vmatpush1.msra.mxu0 0.0
        %400 = vmatprep.subr.mxu0 0.0
        %401 = vmatpush1.msra.mxu0 0.0
        %402 = vmatprep.subr.mxu0 %v366
        %403 = vmatpush1.msra.mxu0 %v363
        %404 = vmatprep.subr.mxu0 %v300
        %405 = vmatpush1.msra.mxu0 %v299
        %406 = vmatprep.subr.mxu0 %v292
        %407 = vmatpush1.msra.mxu0 %v291
        %408 = vmatprep.subr.mxu0 %v284
        %409 = vmatpush1.msra.mxu0 %v283
        %410 = vmatprep.subr.mxu0 %v276
        %411 = vmatpush1.msra.mxu0 %v275
        %412 = vmatprep.subr.mxu0 %v268
        %413 = vmatpush1.msra.mxu0 %v267
        %414 = vmatprep.subr.mxu0 %v260
        %415 = vmatpush1.msra.mxu0 %v259
        %416 = vmatprep.subr.mxu0 %v252
        %417 = vmatpush1.msra.mxu0 %v251
        %418 = vmatprep.subr.mxu0 0.0
        %419 = vmatpush2.msra.mxu0 0.0
        %420 = vmatprep.subr.mxu0 0.0
        %421 = vmatpush2.msra.mxu0 0.0
        %422 = vmatprep.subr.mxu0 0.0
        %423 = vmatpush2.msra.mxu0 0.0
        %424 = vmatprep.subr.mxu0 0.0
        %425 = vmatpush2.msra.mxu0 0.0
        %426 = vmatprep.subr.mxu0 0.0
        %427 = vmatpush2.msra.mxu0 0.0
        %428 = vmatprep.subr.mxu0 0.0
        %429 = vmatpush2.msra.mxu0 0.0
        %430 = vmatprep.subr.mxu0 0.0
        %431 = vmatpush2.msra.mxu0 0.0
        %432 = vmatprep.subr.mxu0 0.0
        %433 = vmatpush2.msra.mxu0 0.0
        %434 = vmatprep.subr.mxu0 0.0
        %435 = vmatpush2.msra.mxu0 0.0
        %436 = vmatprep.subr.mxu0 0.0
        %437 = vmatpush2.msra.mxu0 0.0
        %438 = vmatprep.subr.mxu0 0.0
        %439 = vmatpush2.msra.mxu0 0.0
        %440 = vmatprep.subr.mxu0 0.0
        %441 = vmatpush2.msra.mxu0 0.0
        %442 = vmatprep.subr.mxu0 0.0
        %443 = vmatpush2.msra.mxu0 0.0
        %444 = vmatprep.subr.mxu0 0.0
        %445 = vmatpush2.msra.mxu0 0.0
        %446 = vmatprep.subr.mxu0 0.0
        %447 = vmatpush2.msra.mxu0 0.0
        %448 = vmatprep.subr.mxu0 0.0
        %449 = vmatpush2.msra.mxu0 0.0
        %450 = vmatprep.mubr.f32.mxu0 0.0
        %451 = vmatmul.mubr.f32.gmra.mxu0 %v359
        %v452 = vpop.f32.mrf.mxu0
        %v453 = vadd.f32 %v320, %v452
        %v454 = vpop.f32.mrf.mxu0
        %v455 = vadd.f32 %v324, %v454
        %456 = vdwg.mxu0
        %457 = vmatprep.subr.mxu0 0.0
        %458 = vmatpush1.msra.mxu0 0.0
        %459 = vmatprep.subr.mxu0 0.0
        %460 = vmatpush1.msra.mxu0 0.0
        %461 = vmatprep.subr.mxu0 0.0
        %462 = vmatpush1.msra.mxu0 0.0
        %463 = vmatprep.subr.mxu0 0.0
        %464 = vmatpush1.msra.mxu0 0.0
        %465 = vmatprep.subr.mxu0 0.0
        %466 = vmatpush1.msra.mxu0 0.0
        %467 = vmatprep.subr.mxu0 0.0
        %468 = vmatpush1.msra.mxu0 0.0
        %469 = vmatprep.subr.mxu0 0.0
        %470 = vmatpush1.msra.mxu0 0.0
        %471 = vmatprep.subr.mxu0 0.0
        %472 = vmatpush1.msra.mxu0 0.0
        %473 = vmatprep.subr.mxu0 %v372
        %474 = vmatpush1.msra.mxu0 %v369
        %475 = vmatprep.subr.mxu0 %v302
        %476 = vmatpush1.msra.mxu0 %v301
        %477 = vmatprep.subr.mxu0 %v294
        %478 = vmatpush1.msra.mxu0 %v293
        %479 = vmatprep.subr.mxu0 %v286
        %480 = vmatpush1.msra.mxu0 %v285
        %481 = vmatprep.subr.mxu0 %v278
        %482 = vmatpush1.msra.mxu0 %v277
        %483 = vmatprep.subr.mxu0 %v270
        %484 = vmatpush1.msra.mxu0 %v269
        %485 = vmatprep.subr.mxu0 %v262
        %486 = vmatpush1.msra.mxu0 %v261
        %487 = vmatprep.subr.mxu0 %v254
        %488 = vmatpush1.msra.mxu0 %v253
        %489 = vmatprep.subr.mxu0 0.0
        %490 = vmatpush2.msra.mxu0 0.0
        %491 = vmatprep.subr.mxu0 0.0
        %492 = vmatpush2.msra.mxu0 0.0
        %493 = vmatprep.subr.mxu0 0.0
        %494 = vmatpush2.msra.mxu0 0.0
        %495 = vmatprep.subr.mxu0 0.0
        %496 = vmatpush2.msra.mxu0 0.0
        %497 = vmatprep.subr.mxu0 0.0
        %498 = vmatpush2.msra.mxu0 0.0
        %499 = vmatprep.subr.mxu0 0.0
        %500 = vmatpush2.msra.mxu0 0.0
        %501 = vmatprep.subr.mxu0 0.0
        %502 = vmatpush2.msra.mxu0 0.0
        %503 = vmatprep.subr.mxu0 0.0
        %504 = vmatpush2.msra.mxu0 0.0
        %505 = vmatprep.subr.mxu0 0.0
        %506 = vmatpush2.msra.mxu0 0.0
        %507 = vmatprep.subr.mxu0 0.0
        %508 = vmatpush2.msra.mxu0 0.0
        %509 = vmatprep.subr.mxu0 0.0
        %510 = vmatpush2.msra.mxu0 0.0
        %511 = vmatprep.subr.mxu0 0.0
        %512 = vmatpush2.msra.mxu0 0.0
        %513 = vmatprep.subr.mxu0 0.0
        %514 = vmatpush2.msra.mxu0 0.0
        %515 = vmatprep.subr.mxu0 0.0
        %516 = vmatpush2.msra.mxu0 0.0
        %517 = vmatprep.subr.mxu0 0.0
        %518 = vmatpush2.msra.mxu0 0.0
        %519 = vmatprep.subr.mxu0 0.0
        %520 = vmatpush2.msra.mxu0 0.0
        %521 = vmatprep.mubr.f32.mxu0 0.0
        %522 = vmatmul.mubr.f32.gmra.mxu0 %v359
        %v523 = vpop.f32.mrf.mxu0
        %v524 = vadd.f32 %v328, %v523
        %v525 = vpop.f32.mrf.mxu0
        %v526 = vadd.f32 %v332, %v525
        %527 = vdwg.mxu0
        %528 = vmatprep.subr.mxu0 0.0
        %529 = vmatpush1.msra.mxu0 0.0
        %530 = vmatprep.subr.mxu0 0.0
        %531 = vmatpush1.msra.mxu0 0.0
        %532 = vmatprep.subr.mxu0 0.0
        %533 = vmatpush1.msra.mxu0 0.0
        %534 = vmatprep.subr.mxu0 0.0
        %535 = vmatpush1.msra.mxu0 0.0
        %536 = vmatprep.subr.mxu0 0.0
        %537 = vmatpush1.msra.mxu0 0.0
        %538 = vmatprep.subr.mxu0 0.0
        %539 = vmatpush1.msra.mxu0 0.0
        %540 = vmatprep.subr.mxu0 0.0
        %541 = vmatpush1.msra.mxu0 0.0
        %542 = vmatprep.subr.mxu0 0.0
        %543 = vmatpush1.msra.mxu0 0.0
        %544 = vmatprep.subr.mxu0 %v378
        %545 = vmatpush1.msra.mxu0 %v375
        %546 = vmatprep.subr.mxu0 %v304
        %547 = vmatpush1.msra.mxu0 %v303
        %548 = vmatprep.subr.mxu0 %v296
        %549 = vmatpush1.msra.mxu0 %v295
        %550 = vmatprep.subr.mxu0 %v288
        %551 = vmatpush1.msra.mxu0 %v287
        %552 = vmatprep.subr.mxu0 %v280
        %553 = vmatpush1.msra.mxu0 %v279
        %554 = vmatprep.subr.mxu0 %v272
        %555 = vmatpush1.msra.mxu0 %v271
        %556 = vmatprep.subr.mxu0 %v264
        %557 = vmatpush1.msra.mxu0 %v263
        %558 = vmatprep.subr.mxu0 %v256
        %559 = vmatpush1.msra.mxu0 %v255
        %560 = vmatprep.subr.mxu0 0.0
        %561 = vmatpush2.msra.mxu0 0.0
        %562 = vmatprep.subr.mxu0 0.0
        %563 = vmatpush2.msra.mxu0 0.0
        %564 = vmatprep.subr.mxu0 0.0
        %565 = vmatpush2.msra.mxu0 0.0
        %566 = vmatprep.subr.mxu0 0.0
        %567 = vmatpush2.msra.mxu0 0.0
        %568 = vmatprep.subr.mxu0 0.0
        %569 = vmatpush2.msra.mxu0 0.0
        %570 = vmatprep.subr.mxu0 0.0
        %571 = vmatpush2.msra.mxu0 0.0
        %572 = vmatprep.subr.mxu0 0.0
        %573 = vmatpush2.msra.mxu0 0.0
        %574 = vmatprep.subr.mxu0 0.0
        %575 = vmatpush2.msra.mxu0 0.0
        %576 = vmatprep.subr.mxu0 0.0
        %577 = vmatpush2.msra.mxu0 0.0
        %578 = vmatprep.subr.mxu0 0.0
        %579 = vmatpush2.msra.mxu0 0.0
        %580 = vmatprep.subr.mxu0 0.0
        %581 = vmatpush2.msra.mxu0 0.0
        %582 = vmatprep.subr.mxu0 0.0
        %583 = vmatpush2.msra.mxu0 0.0
        %584 = vmatprep.subr.mxu0 0.0
        %585 = vmatpush2.msra.mxu0 0.0
        %586 = vmatprep.subr.mxu0 0.0
        %587 = vmatpush2.msra.mxu0 0.0
        %588 = vmatprep.subr.mxu0 0.0
        %589 = vmatpush2.msra.mxu0 0.0
        %590 = vmatprep.subr.mxu0 0.0
        %591 = vmatpush2.msra.mxu0 0.0
        %592 = vmatprep.mubr.f32.mxu0 0.0
        %593 = vmatmul.mubr.f32.gmra.mxu0 %v359
        %v594 = vpop.f32.mrf.mxu0
        %v595 = vadd.f32 %v336, %v594
        %v596 = vpop.f32.mrf.mxu0
        %v597 = vadd.f32 %v340, %v596
        %598 = vdwg.mxu0
        %599 = vmatprep.subr.mxu0 0.0
        %600 = vmatpush1.msra.mxu0 0.0
        %601 = vmatprep.subr.mxu0 0.0
        %602 = vmatpush1.msra.mxu0 0.0
        %603 = vmatprep.subr.mxu0 0.0
        %604 = vmatpush1.msra.mxu0 0.0
        %605 = vmatprep.subr.mxu0 0.0
        %606 = vmatpush1.msra.mxu0 0.0
        %607 = vmatprep.subr.mxu0 0.0
        %608 = vmatpush1.msra.mxu0 0.0
        %609 = vmatprep.subr.mxu0 0.0
        %610 = vmatpush1.msra.mxu0 0.0
        %611 = vmatprep.subr.mxu0 0.0
        %612 = vmatpush1.msra.mxu0 0.0
        %613 = vmatprep.subr.mxu0 0.0
        %614 = vmatpush1.msra.mxu0 0.0
        %615 = vmatprep.subr.mxu0 %v384
        %616 = vmatpush1.msra.mxu0 %v381
        %617 = vmatprep.subr.mxu0 %v306
        %618 = vmatpush1.msra.mxu0 %v305
        %619 = vmatprep.subr.mxu0 %v298
        %620 = vmatpush1.msra.mxu0 %v297
        %621 = vmatprep.subr.mxu0 %v290
        %622 = vmatpush1.msra.mxu0 %v289
        %623 = vmatprep.subr.mxu0 %v282
        %624 = vmatpush1.msra.mxu0 %v281
        %625 = vmatprep.subr.mxu0 %v274
        %626 = vmatpush1.msra.mxu0 %v273
        %627 = vmatprep.subr.mxu0 %v266
        %628 = vmatpush1.msra.mxu0 %v265
        %629 = vmatprep.subr.mxu0 %v258
        %630 = vmatpush1.msra.mxu0 %v257
        %631 = vmatprep.subr.mxu0 0.0
        %632 = vmatpush2.msra.mxu0 0.0
        %633 = vmatprep.subr.mxu0 0.0
        %634 = vmatpush2.msra.mxu0 0.0
        %635 = vmatprep.subr.mxu0 0.0
        %636 = vmatpush2.msra.mxu0 0.0
        %637 = vmatprep.subr.mxu0 0.0
        %638 = vmatpush2.msra.mxu0 0.0
        %639 = vmatprep.subr.mxu0 0.0
        %640 = vmatpush2.msra.mxu0 0.0
        %641 = vmatprep.subr.mxu0 0.0
        %642 = vmatpush2.msra.mxu0 0.0
        %643 = vmatprep.subr.mxu0 0.0
        %644 = vmatpush2.msra.mxu0 0.0
        %645 = vmatprep.subr.mxu0 0.0
        %646 = vmatpush2.msra.mxu0 0.0
        %647 = vmatprep.subr.mxu0 0.0
        %648 = vmatpush2.msra.mxu0 0.0
        %649 = vmatprep.subr.mxu0 0.0
        %650 = vmatpush2.msra.mxu0 0.0
        %651 = vmatprep.subr.mxu0 0.0
        %652 = vmatpush2.msra.mxu0 0.0
        %653 = vmatprep.subr.mxu0 0.0
        %654 = vmatpush2.msra.mxu0 0.0
        %655 = vmatprep.subr.mxu0 0.0
        %656 = vmatpush2.msra.mxu0 0.0
        %657 = vmatprep.subr.mxu0 0.0
        %658 = vmatpush2.msra.mxu0 0.0
        %659 = vmatprep.subr.mxu0 0.0
        %660 = vmatpush2.msra.mxu0 0.0
        %661 = vmatprep.subr.mxu0 0.0
        %662 = vmatpush2.msra.mxu0 0.0
        %663 = vmatprep.mubr.f32.mxu0 0.0
        %664 = vmatmul.mubr.f32.gmra.mxu0 %v359
        %v665 = vpop.f32.mrf.mxu0
        %v666 = vadd.f32 %v344, %v665
        %v667 = vpop.f32.mrf.mxu0
        %v668 = vadd.f32 %v348, %v667
        %669 = vdwg.mxu0
        %v670 = vmax.f32 %v453, 0.0
        %v671 = vmax.f32 %v455, 0.0
        %v672 = vmax.f32 %v524, 0.0
        %v673 = vmax.f32 %v526, 0.0
        %v674 = vmax.f32 %v595, 0.0
        %v675 = vmax.f32 %v597, 0.0
        %v676 = vmax.f32 %v666, 0.0
        %v677 = vmax.f32 %v668, 0.0
        %v678 = vld [vmem:[#allocation5] sm:$0xff]
        %v679 = vld [vmem:[#allocation5 + $0x8] sm:$0xff]
        %v680 = vld [vmem:[#allocation5 + $0x10] sm:$0xff]
        %v681 = vld [vmem:[#allocation5 + $0x18] sm:$0xff]
        %v682 = vld [vmem:[#allocation5 + $0x20] sm:$0xff]
        %v683 = vld [vmem:[#allocation5 + $0x28] sm:$0xff]
        %v684 = vld [vmem:[#allocation5 + $0x30] sm:$0xff]
        %v685 = vld [vmem:[#allocation5 + $0x38] sm:$0xff]
        %v686 = vld [vmem:[#allocation5 + $0x40] sm:$0xff]
        %v687 = vld [vmem:[#allocation5 + $0x48] sm:$0xff]
        %v688 = vld [vmem:[#allocation5 + $0x50] sm:$0xff]
        %v689 = vld [vmem:[#allocation5 + $0x58] sm:$0xff]
        %v690 = vld [vmem:[#allocation5 + $0x60] sm:$0xff]
        %v691 = vld [vmem:[#allocation5 + $0x68] sm:$0xff]
        %v692 = vld [vmem:[#allocation5 + $0x70] sm:$0xff]
        %v693 = vld [vmem:[#allocation5 + $0x78] sm:$0xff]
        %v694 = vld [vmem:[#allocation5 + $0x80] sm:$0xff]
        %v695 = vld [vmem:[#allocation5 + $0x88] sm:$0xff]
        %v696 = vld [vmem:[#allocation5 + $0x90] sm:$0xff]
        %v697 = vld [vmem:[#allocation5 + $0x98] sm:$0xff]
        %v698 = vld [vmem:[#allocation5 + $0xa0] sm:$0xff]
        %v699 = vld [vmem:[#allocation5 + $0xa8] sm:$0xff]
        %v700 = vld [vmem:[#allocation5 + $0xb0] sm:$0xff]
        %v701 = vld [vmem:[#allocation5 + $0xb8] sm:$0xff]
        %v702 = vld [vmem:[#allocation5 + $0xc0] sm:$0xff]
        %v703 = vld [vmem:[#allocation5 + $0xc8] sm:$0xff]
        %v704 = vld [vmem:[#allocation5 + $0xd0] sm:$0xff]
        %v705 = vld [vmem:[#allocation5 + $0xd8] sm:$0xff]
        %v706 = vld [vmem:[#allocation5 + $0xe0] sm:$0xff]
        %v707 = vld [vmem:[#allocation5 + $0xe8] sm:$0xff]
        %v708 = vld [vmem:[#allocation5 + $0xf0] sm:$0xff]
        %v709 = vld [vmem:[#allocation5 + $0xf8] sm:$0xff]
        %v710 = vld [vmem:[#allocation5 + $0x100] sm:$0xff]
        %v711 = vld [vmem:[#allocation5 + $0x108] sm:$0xff]
        %v712 = vld [vmem:[#allocation5 + $0x110] sm:$0xff]
        %v713 = vld [vmem:[#allocation5 + $0x118] sm:$0xff]
        %v714 = vld [vmem:[#allocation5 + $0x120] sm:$0xff]
        %v715 = vld [vmem:[#allocation5 + $0x128] sm:$0xff]
        %v716 = vld [vmem:[#allocation5 + $0x130] sm:$0xff]
        %v717 = vld [vmem:[#allocation5 + $0x138] sm:$0xff]
        %v718 = vld [vmem:[#allocation5 + $0x140] sm:$0xff]
        %v719 = vld [vmem:[#allocation5 + $0x148] sm:$0xff]
        %v720 = vld [vmem:[#allocation5 + $0x150] sm:$0xff]
        %v721 = vld [vmem:[#allocation5 + $0x158] sm:$0xff]
        %v722 = vld [vmem:[#allocation5 + $0x160] sm:$0xff]
        %v723 = vld [vmem:[#allocation5 + $0x168] sm:$0xff]
        %v724 = vld [vmem:[#allocation5 + $0x170] sm:$0xff]
        %v725 = vld [vmem:[#allocation5 + $0x178] sm:$0xff]
        %v726 = vld [vmem:[#allocation5 + $0x180] sm:$0xff]
        %v727 = vld [vmem:[#allocation5 + $0x188] sm:$0xff]
        %v728 = vld [vmem:[#allocation5 + $0x190] sm:$0xff]
        %v729 = vld [vmem:[#allocation5 + $0x198] sm:$0xff]
        %v730 = vld [vmem:[#allocation5 + $0x1a0] sm:$0xff]
        %v731 = vld [vmem:[#allocation5 + $0x1a8] sm:$0xff]
        %v732 = vld [vmem:[#allocation5 + $0x1b0] sm:$0xff]
        %v733 = vld [vmem:[#allocation5 + $0x1b8] sm:$0xff]
        %v734 = vld [vmem:[#allocation5 + $0x1c0] sm:$0xff]
        %v735 = vld [vmem:[#allocation5 + $0x1c8] sm:$0xff]
        %v736 = vld [vmem:[#allocation5 + $0x1d0] sm:$0xff]
        %v737 = vld [vmem:[#allocation5 + $0x1d8] sm:$0xff]
        %v738 = vld [vmem:[#allocation5 + $0x1e0] sm:$0xff]
        %v739 = vld [vmem:[#allocation5 + $0x1e8] sm:$0xff]
        %v740 = vld [vmem:[#allocation5 + $0x1f0] sm:$0xff]
        %v741 = vld [vmem:[#allocation5 + $0x1f8] sm:$0xff]
        %v742 = vld [vmem:[#allocation5 + $0x200] sm:$0xff]
        %v743 = vld [vmem:[#allocation5 + $0x208] sm:$0xff]
        %v744 = vld [vmem:[#allocation5 + $0x210] sm:$0xff]
        %v745 = vld [vmem:[#allocation5 + $0x218] sm:$0xff]
        %v746 = vld [vmem:[#allocation5 + $0x220] sm:$0xff]
        %v747 = vld [vmem:[#allocation5 + $0x228] sm:$0xff]
        %v748 = vld [vmem:[#allocation5 + $0x230] sm:$0xff]
        %v749 = vld [vmem:[#allocation5 + $0x238] sm:$0xff]
        %v750 = vld [vmem:[#allocation5 + $0x240] sm:$0xff]
        %v751 = vld [vmem:[#allocation5 + $0x248] sm:$0xff]
        %v752 = vld [vmem:[#allocation5 + $0x250] sm:$0xff]
        %v753 = vld [vmem:[#allocation5 + $0x258] sm:$0xff]
        %v754 = vld [vmem:[#allocation5 + $0x260] sm:$0xff]
        %v755 = vld [vmem:[#allocation5 + $0x268] sm:$0xff]
        %v756 = vld [vmem:[#allocation5 + $0x270] sm:$0xff]
        %v757 = vld [vmem:[#allocation5 + $0x278] sm:$0xff]
        %v758 = vld [vmem:[#allocation5 + $0x280] sm:$0xff]
        %v759 = vld [vmem:[#allocation5 + $0x288] sm:$0xff]
        %v760 = vld [vmem:[#allocation5 + $0x290] sm:$0xff]
        %v761 = vld [vmem:[#allocation5 + $0x298] sm:$0xff]
        %v762 = vld [vmem:[#allocation5 + $0x2a0] sm:$0xff]
        %v763 = vld [vmem:[#allocation5 + $0x2a8] sm:$0xff]
        %v764 = vld [vmem:[#allocation5 + $0x2b0] sm:$0xff]
        %v765 = vld [vmem:[#allocation5 + $0x2b8] sm:$0xff]
        %v766 = vld [vmem:[#allocation5 + $0x2c0] sm:$0xff]
        %v767 = vld [vmem:[#allocation5 + $0x2c8] sm:$0xff]
        %v768 = vld [vmem:[#allocation5 + $0x2d0] sm:$0xff]
        %v769 = vld [vmem:[#allocation5 + $0x2d8] sm:$0xff]
        %v770 = vld [vmem:[#allocation5 + $0x2e0] sm:$0xff]
        %v771 = vld [vmem:[#allocation5 + $0x2e8] sm:$0xff]
        %v772 = vld [vmem:[#allocation5 + $0x2f0] sm:$0xff]
        %v773 = vld [vmem:[#allocation5 + $0x2f8] sm:$0xff]
        %v774 = vld [vmem:[#allocation5 + $0x300] sm:$0xff]
        %v775 = vld [vmem:[#allocation5 + $0x308] sm:$0xff]
        %v776 = vld [vmem:[#allocation5 + $0x310] sm:$0xff]
        %v777 = vld [vmem:[#allocation5 + $0x318] sm:$0xff]
        %v778 = vld [vmem:[#allocation5 + $0x320] sm:$0xff]
        %v779 = vld [vmem:[#allocation5 + $0x328] sm:$0xff]
        %v780 = vld [vmem:[#allocation5 + $0x330] sm:$0xff]
        %v781 = vld [vmem:[#allocation5 + $0x338] sm:$0xff]
        %v782 = vld [vmem:[#allocation5 + $0x340] sm:$0xff]
        %v783 = vld [vmem:[#allocation5 + $0x348] sm:$0xff]
        %v784 = vld [vmem:[#allocation5 + $0x350] sm:$0xff]
        %v785 = vld [vmem:[#allocation5 + $0x358] sm:$0xff]
        %v786 = vld [vmem:[#allocation5 + $0x360] sm:$0xff]
        %v787 = vld [vmem:[#allocation5 + $0x368] sm:$0xff]
        %v788 = vld [vmem:[#allocation5 + $0x370] sm:$0xff]
        %v789 = vld [vmem:[#allocation5 + $0x378] sm:$0xff]
        %v790 = vld [vmem:[#allocation5 + $0x380] sm:$0xff]
        %v791 = vld [vmem:[#allocation5 + $0x388] sm:$0xff]
        %v792 = vld [vmem:[#allocation5 + $0x390] sm:$0xff]
        %v793 = vld [vmem:[#allocation5 + $0x398] sm:$0xff]
        %v794 = vld [vmem:[#allocation5 + $0x3a0] sm:$0xff]
        %v795 = vld [vmem:[#allocation5 + $0x3a8] sm:$0xff]
        %v796 = vld [vmem:[#allocation5 + $0x3b0] sm:$0xff]
        %v797 = vld [vmem:[#allocation5 + $0x3b8] sm:$0xff]
        %v798 = vld [vmem:[#allocation5 + $0x3c0] sm:$0xff]
        %v799 = vld [vmem:[#allocation5 + $0x3c8] sm:$0xff]
        %v800 = vld [vmem:[#allocation5 + $0x3d0] sm:$0xff]
        %v801 = vld [vmem:[#allocation5 + $0x3d8] sm:$0xff]
        %v802 = vld [vmem:[#allocation5 + $0x3e0] sm:$0xff]
        %v803 = vld [vmem:[#allocation5 + $0x3e8] sm:$0xff]
        %v804 = vld [vmem:[#allocation5 + $0x3f0] sm:$0xff]
        %v805 = vld [vmem:[#allocation5 + $0x3f8] sm:$0xff]
        %v806 = vld [vmem:[%s4] sm:$0x1]
        %v808 = vlaneseq
        %v809 = vshrl.u32 %v808, 7
        %v810 = vsub.s32 0, %v809
        %v811 = vrot.slane %v806, %v810
        %813 = vmatprep.subr.mxu0 0.0
        %814 = vmatpush1.msra.mxu0 %v693
        %815 = vmatprep.subr.mxu0 0.0
        %816 = vmatpush1.msra.mxu0 %v692
        %817 = vmatprep.subr.mxu0 0.0
        %818 = vmatpush1.msra.mxu0 %v691
        %819 = vmatprep.subr.mxu0 0.0
        %820 = vmatpush1.msra.mxu0 %v690
        %821 = vmatprep.subr.mxu0 0.0
        %822 = vmatpush1.msra.mxu0 %v689
        %823 = vmatprep.subr.mxu0 0.0
        %824 = vmatpush1.msra.mxu0 %v688
        %825 = vmatprep.subr.mxu0 0.0
        %826 = vmatpush1.msra.mxu0 %v687
        %827 = vmatprep.subr.mxu0 0.0
        %828 = vmatpush1.msra.mxu0 %v686
        %829 = vmatprep.subr.mxu0 0.0
        %830 = vmatpush1.msra.mxu0 %v685
        %831 = vmatprep.subr.mxu0 0.0
        %832 = vmatpush1.msra.mxu0 %v684
        %833 = vmatprep.subr.mxu0 0.0
        %834 = vmatpush1.msra.mxu0 %v683
        %835 = vmatprep.subr.mxu0 0.0
        %836 = vmatpush1.msra.mxu0 %v682
        %837 = vmatprep.subr.mxu0 0.0
        %838 = vmatpush1.msra.mxu0 %v681
        %839 = vmatprep.subr.mxu0 0.0
        %840 = vmatpush1.msra.mxu0 %v680
        %841 = vmatprep.subr.mxu0 0.0
        %842 = vmatpush1.msra.mxu0 %v679
        %843 = vmatprep.subr.mxu0 0.0
        %844 = vmatpush1.msra.mxu0 %v678
        %845 = vmatprep.subr.mxu0 0.0
        %846 = vmatpush2.msra.mxu0 %v709
        %847 = vmatprep.subr.mxu0 0.0
        %848 = vmatpush2.msra.mxu0 %v708
        %849 = vmatprep.subr.mxu0 0.0
        %850 = vmatpush2.msra.mxu0 %v707
        %851 = vmatprep.subr.mxu0 0.0
        %852 = vmatpush2.msra.mxu0 %v706
        %853 = vmatprep.subr.mxu0 0.0
        %854 = vmatpush2.msra.mxu0 %v705
        %855 = vmatprep.subr.mxu0 0.0
        %856 = vmatpush2.msra.mxu0 %v704
        %857 = vmatprep.subr.mxu0 0.0
        %858 = vmatpush2.msra.mxu0 %v703
        %859 = vmatprep.subr.mxu0 0.0
        %860 = vmatpush2.msra.mxu0 %v702
        %861 = vmatprep.subr.mxu0 0.0
        %862 = vmatpush2.msra.mxu0 %v701
        %863 = vmatprep.subr.mxu0 0.0
        %864 = vmatpush2.msra.mxu0 %v700
        %865 = vmatprep.subr.mxu0 0.0
        %866 = vmatpush2.msra.mxu0 %v699
        %867 = vmatprep.subr.mxu0 0.0
        %868 = vmatpush2.msra.mxu0 %v698
        %869 = vmatprep.subr.mxu0 0.0
        %870 = vmatpush2.msra.mxu0 %v697
        %871 = vmatprep.subr.mxu0 0.0
        %872 = vmatpush2.msra.mxu0 %v696
        %873 = vmatprep.subr.mxu0 0.0
        %874 = vmatpush2.msra.mxu0 %v695
        %875 = vmatprep.subr.mxu0 0.0
        %876 = vmatpush2.msra.mxu0 %v694
        %877 = vmatprep.mubr.f32.mxu0 %v671
        %878 = vmatmul.mubr.f32.gmra.mxu0 %v670
        %v879 = vpop.f32.mrf.mxu0
        %v880 = vadd.f32 %v811, %v879
        %v881 = vpop.f32.mrf.mxu0
        %882 = vdwg.mxu0
        %883 = vmatprep.subr.mxu0 0.0
        %884 = vmatpush1.msra.mxu0 %v725
        %885 = vmatprep.subr.mxu0 0.0
        %886 = vmatpush1.msra.mxu0 %v724
        %887 = vmatprep.subr.mxu0 0.0
        %888 = vmatpush1.msra.mxu0 %v723
        %889 = vmatprep.subr.mxu0 0.0
        %890 = vmatpush1.msra.mxu0 %v722
        %891 = vmatprep.subr.mxu0 0.0
        %892 = vmatpush1.msra.mxu0 %v721
        %893 = vmatprep.subr.mxu0 0.0
        %894 = vmatpush1.msra.mxu0 %v720
        %895 = vmatprep.subr.mxu0 0.0
        %896 = vmatpush1.msra.mxu0 %v719
        %897 = vmatprep.subr.mxu0 0.0
        %898 = vmatpush1.msra.mxu0 %v718
        %899 = vmatprep.subr.mxu0 0.0
        %900 = vmatpush1.msra.mxu0 %v717
        %901 = vmatprep.subr.mxu0 0.0
        %902 = vmatpush1.msra.mxu0 %v716
        %903 = vmatprep.subr.mxu0 0.0
        %904 = vmatpush1.msra.mxu0 %v715
        %905 = vmatprep.subr.mxu0 0.0
        %906 = vmatpush1.msra.mxu0 %v714
        %907 = vmatprep.subr.mxu0 0.0
        %908 = vmatpush1.msra.mxu0 %v713
        %909 = vmatprep.subr.mxu0 0.0
        %910 = vmatpush1.msra.mxu0 %v712
        %911 = vmatprep.subr.mxu0 0.0
        %912 = vmatpush1.msra.mxu0 %v711
        %913 = vmatprep.subr.mxu0 0.0
        %914 = vmatpush1.msra.mxu0 %v710
        %915 = vmatprep.subr.mxu0 0.0
        %916 = vmatpush2.msra.mxu0 %v741
        %917 = vmatprep.subr.mxu0 0.0
        %918 = vmatpush2.msra.mxu0 %v740
        %919 = vmatprep.subr.mxu0 0.0
        %920 = vmatpush2.msra.mxu0 %v739
        %921 = vmatprep.subr.mxu0 0.0
        %922 = vmatpush2.msra.mxu0 %v738
        %923 = vmatprep.subr.mxu0 0.0
        %924 = vmatpush2.msra.mxu0 %v737
        %925 = vmatprep.subr.mxu0 0.0
        %926 = vmatpush2.msra.mxu0 %v736
        %927 = vmatprep.subr.mxu0 0.0
        %928 = vmatpush2.msra.mxu0 %v735
        %929 = vmatprep.subr.mxu0 0.0
        %930 = vmatpush2.msra.mxu0 %v734
        %931 = vmatprep.subr.mxu0 0.0
        %932 = vmatpush2.msra.mxu0 %v733
        %933 = vmatprep.subr.mxu0 0.0
        %934 = vmatpush2.msra.mxu0 %v732
        %935 = vmatprep.subr.mxu0 0.0
        %936 = vmatpush2.msra.mxu0 %v731
        %937 = vmatprep.subr.mxu0 0.0
        %938 = vmatpush2.msra.mxu0 %v730
        %939 = vmatprep.subr.mxu0 0.0
        %940 = vmatpush2.msra.mxu0 %v729
        %941 = vmatprep.subr.mxu0 0.0
        %942 = vmatpush2.msra.mxu0 %v728
        %943 = vmatprep.subr.mxu0 0.0
        %944 = vmatpush2.msra.mxu0 %v727
        %945 = vmatprep.subr.mxu0 0.0
        %946 = vmatpush2.msra.mxu0 %v726
        %947 = vmatprep.mubr.f32.mxu0 %v673
        %948 = vmatmul.mubr.f32.gmra.mxu0 %v672
        %v949 = vpop.f32.mrf.mxu0
        %v950 = vadd.f32 %v880, %v949
        %v951 = vpop.f32.mrf.mxu0
        %952 = vdwg.mxu0
        %953 = vmatprep.subr.mxu0 0.0
        %954 = vmatpush1.msra.mxu0 %v757
        %955 = vmatprep.subr.mxu0 0.0
        %956 = vmatpush1.msra.mxu0 %v756
        %957 = vmatprep.subr.mxu0 0.0
        %958 = vmatpush1.msra.mxu0 %v755
        %959 = vmatprep.subr.mxu0 0.0
        %960 = vmatpush1.msra.mxu0 %v754
        %961 = vmatprep.subr.mxu0 0.0
        %962 = vmatpush1.msra.mxu0 %v753
        %963 = vmatprep.subr.mxu0 0.0
        %964 = vmatpush1.msra.mxu0 %v752
        %965 = vmatprep.subr.mxu0 0.0
        %966 = vmatpush1.msra.mxu0 %v751
        %967 = vmatprep.subr.mxu0 0.0
        %968 = vmatpush1.msra.mxu0 %v750
        %969 = vmatprep.subr.mxu0 0.0
        %970 = vmatpush1.msra.mxu0 %v749
        %971 = vmatprep.subr.mxu0 0.0
        %972 = vmatpush1.msra.mxu0 %v748
        %973 = vmatprep.subr.mxu0 0.0
        %974 = vmatpush1.msra.mxu0 %v747
        %975 = vmatprep.subr.mxu0 0.0
        %976 = vmatpush1.msra.mxu0 %v746
        %977 = vmatprep.subr.mxu0 0.0
        %978 = vmatpush1.msra.mxu0 %v745
        %979 = vmatprep.subr.mxu0 0.0
        %980 = vmatpush1.msra.mxu0 %v744
        %981 = vmatprep.subr.mxu0 0.0
        %982 = vmatpush1.msra.mxu0 %v743
        %983 = vmatprep.subr.mxu0 0.0
        %984 = vmatpush1.msra.mxu0 %v742
        %985 = vmatprep.subr.mxu0 0.0
        %986 = vmatpush2.msra.mxu0 %v773
        %987 = vmatprep.subr.mxu0 0.0
        %988 = vmatpush2.msra.mxu0 %v772
        %989 = vmatprep.subr.mxu0 0.0
        %990 = vmatpush2.msra.mxu0 %v771
        %991 = vmatprep.subr.mxu0 0.0
        %992 = vmatpush2.msra.mxu0 %v770
        %993 = vmatprep.subr.mxu0 0.0
        %994 = vmatpush2.msra.mxu0 %v769
        %995 = vmatprep.subr.mxu0 0.0
        %996 = vmatpush2.msra.mxu0 %v768
        %997 = vmatprep.subr.mxu0 0.0
        %998 = vmatpush2.msra.mxu0 %v767
        %999 = vmatprep.subr.mxu0 0.0
        %1000 = vmatpush2.msra.mxu0 %v766
        %1001 = vmatprep.subr.mxu0 0.0
        %1002 = vmatpush2.msra.mxu0 %v765
        %1003 = vmatprep.subr.mxu0 0.0
        %1004 = vmatpush2.msra.mxu0 %v764
        %1005 = vmatprep.subr.mxu0 0.0
        %1006 = vmatpush2.msra.mxu0 %v763
        %1007 = vmatprep.subr.mxu0 0.0
        %1008 = vmatpush2.msra.mxu0 %v762
        %1009 = vmatprep.subr.mxu0 0.0
        %1010 = vmatpush2.msra.mxu0 %v761
        %1011 = vmatprep.subr.mxu0 0.0
        %1012 = vmatpush2.msra.mxu0 %v760
        %1013 = vmatprep.subr.mxu0 0.0
        %1014 = vmatpush2.msra.mxu0 %v759
        %1015 = vmatprep.subr.mxu0 0.0
        %1016 = vmatpush2.msra.mxu0 %v758
        %1017 = vmatprep.mubr.f32.mxu0 %v675
        %1018 = vmatmul.mubr.f32.gmra.mxu0 %v674
        %v1019 = vpop.f32.mrf.mxu0
        %v1020 = vadd.f32 %v950, %v1019
        %v1021 = vpop.f32.mrf.mxu0
        %1022 = vdwg.mxu0
        %1023 = vmatprep.subr.mxu0 0.0
        %1024 = vmatpush1.msra.mxu0 %v789
        %1025 = vmatprep.subr.mxu0 0.0
        %1026 = vmatpush1.msra.mxu0 %v788
        %1027 = vmatprep.subr.mxu0 0.0
        %1028 = vmatpush1.msra.mxu0 %v787
        %1029 = vmatprep.subr.mxu0 0.0
        %1030 = vmatpush1.msra.mxu0 %v786
        %1031 = vmatprep.subr.mxu0 0.0
        %1032 = vmatpush1.msra.mxu0 %v785
        %1033 = vmatprep.subr.mxu0 0.0
        %1034 = vmatpush1.msra.mxu0 %v784
        %1035 = vmatprep.subr.mxu0 0.0
        %1036 = vmatpush1.msra.mxu0 %v783
        %1037 = vmatprep.subr.mxu0 0.0
        %1038 = vmatpush1.msra.mxu0 %v782
        %1039 = vmatprep.subr.mxu0 0.0
        %1040 = vmatpush1.msra.mxu0 %v781
        %1041 = vmatprep.subr.mxu0 0.0
        %1042 = vmatpush1.msra.mxu0 %v780
        %1043 = vmatprep.subr.mxu0 0.0
        %1044 = vmatpush1.msra.mxu0 %v779
        %1045 = vmatprep.subr.mxu0 0.0
        %1046 = vmatpush1.msra.mxu0 %v778
        %1047 = vmatprep.subr.mxu0 0.0
        %1048 = vmatpush1.msra.mxu0 %v777
        %1049 = vmatprep.subr.mxu0 0.0
        %1050 = vmatpush1.msra.mxu0 %v776
        %1051 = vmatprep.subr.mxu0 0.0
        %1052 = vmatpush1.msra.mxu0 %v775
        %1053 = vmatprep.subr.mxu0 0.0
        %1054 = vmatpush1.msra.mxu0 %v774
        %1055 = vmatprep.subr.mxu0 0.0
        %1056 = vmatpush2.msra.mxu0 %v805
        %1057 = vmatprep.subr.mxu0 0.0
        %1058 = vmatpush2.msra.mxu0 %v804
        %1059 = vmatprep.subr.mxu0 0.0
        %1060 = vmatpush2.msra.mxu0 %v803
        %1061 = vmatprep.subr.mxu0 0.0
        %1062 = vmatpush2.msra.mxu0 %v802
        %1063 = vmatprep.subr.mxu0 0.0
        %1064 = vmatpush2.msra.mxu0 %v801
        %1065 = vmatprep.subr.mxu0 0.0
        %1066 = vmatpush2.msra.mxu0 %v800
        %1067 = vmatprep.subr.mxu0 0.0
        %1068 = vmatpush2.msra.mxu0 %v799
        %1069 = vmatprep.subr.mxu0 0.0
        %1070 = vmatpush2.msra.mxu0 %v798
        %1071 = vmatprep.subr.mxu0 0.0
        %1072 = vmatpush2.msra.mxu0 %v797
        %1073 = vmatprep.subr.mxu0 0.0
        %1074 = vmatpush2.msra.mxu0 %v796
        %1075 = vmatprep.subr.mxu0 0.0
        %1076 = vmatpush2.msra.mxu0 %v795
        %1077 = vmatprep.subr.mxu0 0.0
        %1078 = vmatpush2.msra.mxu0 %v794
        %1079 = vmatprep.subr.mxu0 0.0
        %1080 = vmatpush2.msra.mxu0 %v793
        %1081 = vmatprep.subr.mxu0 0.0
        %1082 = vmatpush2.msra.mxu0 %v792
        %1083 = vmatprep.subr.mxu0 0.0
        %1084 = vmatpush2.msra.mxu0 %v791
        %1085 = vmatprep.subr.mxu0 0.0
        %1086 = vmatpush2.msra.mxu0 %v790
        %1087 = vmatprep.mubr.f32.mxu0 %v677
        %1088 = vmatmul.mubr.f32.gmra.mxu0 %v676
        %v1089 = vpop.f32.mrf.mxu0
        %v1090 = vadd.f32 %v1020, %v1089
        %v1091 = vpop.f32.mrf.mxu0
        %1092 = vdwg.mxu0
        %1093 = vst [vmem:[%s245] sm:$0xff] %v1090
        %s1094 = sand.u32 %s139, 1
        %s1095 = scalar_lea.sflag [#allocation4], %s1094
        %s1096 = sand.u32 %s139, 1
        %s1097 = smul.addr %s1096, 8
        %s1098 = scalar_lea.vmem [#allocation7], %s1097
        // Predicated region
        $region49: #{cnn003_forward.1} parent=39 // pred_check
          %p1099 = pneg %p149
        $region50: #{cnn003_forward.1} parent=39 // pred_check_branch
          %1101 = sbr.rel (%p1099) target = $region52
        $region51: #{cnn003_forward.1} parent=39 // pred_region
          %s1103 = ssub.s32 128, 128
          %1104 = vsyncadd %s1095, %s1103
          %s1105 = smul.addr %s21, 128
          %s1106 = scalar_lea.hbm %s5, %s1105
          %s1108 = sshll.u32 %s1098, 4
          %s1109 = int_to_ptr.vmem [resolvable:$true] %s1108
          %1111 = dma.vmem_to_hbm [thread:$0]  %s1109, 128, %s1106, %s1095
        $region52: #{cnn003_forward.1} parent=39 // pred_fallthru
          _
      $region40: #{cnn003_forward.1} parent=5 // pred_fallthru
        _
      %p1112 = scmp.le.s32.totalorder 2, %s16
      // Predicated region
      $region53: #{cnn003_forward.1} parent=5 // pred_check
        %p1113 = pneg %p1112
      $region54: #{cnn003_forward.1} parent=5 // pred_check_branch
        %1115 = sbr.rel (%p1113) target = $region56
      $region55: #{cnn003_forward.1} parent=5 // pred_region
        %s1116 = ssub.s32 %s16, 2
        // Predicated region
        $region57: #{cnn003_forward.1} parent=55 // pred_check
          %p1117 = pneg %p155
        $region58: #{cnn003_forward.1} parent=55 // pred_check_branch
          %1119 = sbr.rel (%p1117) target = $region60
        $region59: #{cnn003_forward.1} parent=55 // pred_region
          %s1120 = sand.u32 %s140, 1
          %s1121 = scalar_lea.sflag [#allocation4], %s1120
          %s1122 = sand.u32 %s140, 1
          %s1123 = smul.addr %s1122, 8
          %s1124 = scalar_lea.vmem [#allocation7], %s1123
          %1125 = dma.done %s1121, 128
        $region60: #{cnn003_forward.1} parent=55 // pred_fallthru
          _
      $region56: #{cnn003_forward.1} parent=5 // pred_fallthru
        _
    $region6: #{cnn003_forward.1} parent=1 // loop_footer
      %s20 = sadd.s32 1, %s16
    $region7: #{cnn003_forward.1} parent=1 // loop_footer_branch
      %15 = sbr.rel target = $region3
    $region8: #{cnn003_forward.1} parent=1 // loop_exit
      _
    %1126 = vsyncpa [#allocation3], 1
    %s1127 = scalar_lea.sflag [#allocation3], 1
    %1128 = vsyncpa %s1127, 1
    %1129 = vsyncpa [#allocation6], 1
    %1130 = vsyncpa [#allocation4], 1
    %s1131 = scalar_lea.sflag [#allocation4], 1
    %1132 = vsyncpa %s1131, 1

</llo_original>
